<compile_context>
chip_gen: v7x
topology: tpu7x:2x2x1
jax: 0.10.0
libtpu: 0.0.40
codegen_flags: <defaults>
</compile_context>

<pallas_src>
import functools

import jax
import jax.numpy as jnp
import numpy as np
from jax.experimental import pallas as pl
from jax.experimental.pallas import tpu as pltpu

LN_EPS = 1e-5


def _swap01(t):
  """Swap the two leading dims of a (N, N, C) value, keeping C on the lanes."""
  if hasattr(pltpu, "einshape"):          # layout-aware transpose when available
    return pltpu.einshape("ijc->jic", t)
  return jnp.swapaxes(t, 0, 1)


def _ln_ff_residual(x, gamma, beta, w1, b1, w2, b2):
  """LayerNorm + Linear/ReLU/Linear + residual on (rows, C) f32 data."""
  mean = jnp.mean(x, axis=-1, keepdims=True)
  xc = x - mean
  var = jnp.mean(xc * xc, axis=-1, keepdims=True)   # biased, like nn.LayerNorm
  inv = jax.lax.rsqrt(var + LN_EPS)
  xn = xc * inv * gamma + beta
  h = jnp.dot(xn, w1, preferred_element_type=jnp.float32) + b1
  h = jnp.maximum(h, 0.0)
  out = jnp.dot(h, w2, preferred_element_type=jnp.float32) + b2
  return x + out


# ---------------------------------------------------------------------------
# T == 1: whole (L, L, C) slab per batch element.
# ---------------------------------------------------------------------------
def _full_block_kernel(x_ref, gamma_ref, beta_ref, w1_ref, b1_ref, w2_ref,
                       b2_ref, o_ref):
  l = x_ref.shape[1]
  c = x_ref.shape[3]
  x = x_ref[...].reshape(l * l, c).astype(jnp.float32)
  y = _ln_ff_residual(x, gamma_ref[...], beta_ref[...], w1_ref[...],
                      b1_ref[...], w2_ref[...], b2_ref[...])
  y = y.reshape(l, l, c)
  sym = 0.5 * (y + _swap01(y))
  o_ref[...] = sym.reshape(1, l, l, c).astype(o_ref.dtype)


# ---------------------------------------------------------------------------
# T > 1: triangular block-pair grid with a 2-sub-step inner axis.
# ---------------------------------------------------------------------------
def _pair_kernel(i_ref, j_ref, x_ij_ref, x_ji_ref, gamma_ref, beta_ref,
                 w1_ref, b1_ref, w2_ref, b2_ref, o_ref, y_sc):
  del i_ref, j_ref                       # consumed by the index_maps only
  s = pl.program_id(2)
  tl = x_ij_ref.shape[1]
  c = x_ij_ref.shape[3]

  @pl.when(s == 0)
  def _compute_and_write_upper():
    # Batch both tiles through ONE LayerNorm + FF (2*TL*TL rows per MXU pass).
    rows_ij = x_ij_ref[...].reshape(tl * tl, c).astype(jnp.float32)
    rows_ji = x_ji_ref[...].reshape(tl * tl, c).astype(jnp.float32)
    y_both = _ln_ff_residual(
        jnp.concatenate([rows_ij, rows_ji], axis=0),
        gamma_ref[...], beta_ref[...], w1_ref[...], b1_ref[...],
        w2_ref[...], b2_ref[...])
    y_both = y_both.reshape(2, tl, tl, c)
    y_sc[...] = y_both                                   # park y_ij / y_ji
    sym_ij = 0.5 * (y_both[0] + _swap01(y_both[1]))
    o_ref[...] = sym_ij.reshape(1, tl, tl, c).astype(o_ref.dtype)

  @pl.when(s == 1)
  def _write_lower():
    # out[b, j, i] is the transpose of out[b, i, j]; rebuild it from the parked
    # tiles: no re-read of x (input index unchanged -> DMA elided), no FF rerun.
    sym_ji = 0.5 * (y_sc[1] + _swap01(y_sc[0]))
    o_ref[...] = sym_ji.reshape(1, tl, tl, c).astype(o_ref.dtype)


# ---------------------------------------------------------------------------
# VMEM accounting / tile selection (generation aware, conservative).
# ---------------------------------------------------------------------------
def _round_up(v, m):
  return ((v + m - 1) // m) * m


def _pair_kernel_vmem_bytes(tl, c, h, itemsize):
  """Conservative live-VMEM estimate for the tiled pair kernel."""
  cp = _round_up(c, 128)                  # lane padding when C < 128
  hp = _round_up(h, 128)
  tile_c_f32 = tl * tl * cp * 4           # one (TL, TL, C) tile held as f32
  tile_h_f32 = tl * tl * hp * 4
  io = 3 * 2 * (tl * tl * cp * itemsize)  # 2 inputs + 1 output, double buffered
  scratch = 2 * tile_c_f32                # parked y_ij / y_ji
  temps = 2 * (3 * tile_c_f32 + tile_h_f32)   # x rows, xn, y, h (both tiles)
  weights = (c * hp + h * cp + 4 * cp + 2 * hp) * 4
  return io + scratch + temps + weights


def _vmem_budget_and_limit():
  """Live-data budget + scoped-VMEM limit, derived from the chip generation."""
  try:
    cap = pltpu.get_tpu_info().vmem_capacity_bytes   # 64 MiB v7x, 128 MiB v5e/v6e
  except Exception:
    cap = 64 << 20                                   # assume the smallest (v7x)
  limit = min((cap * 3) // 4, 96 << 20)              # requested scoped-VMEM limit
  budget = limit // 2                                # headroom for compiler temps
  return budget, limit


def _pick_tile_len(L, C, H, itemsize, budget):
  """Largest layout-legal tile length TL (divisor of L) fitting the budget."""
  legal = [t for t in range(8, L, 8) if L % t == 0]
  legal.append(L)                                    # full-L block is always legal
  fitting = [t for t in legal if _pair_kernel_vmem_bytes(t, C, H, itemsize) <= budget]
  if fitting:
    return max(fitting)
  # Nothing fits the budget: take the smallest legal tile rather than silently
  # falling back to a full-L block that certainly will not fit either.
  return min(legal)


# ---------------------------------------------------------------------------
# Wrapper.
# ---------------------------------------------------------------------------
@functools.partial(jax.jit, static_argnames=("force_tile_len",))
def iterative_refinement_forward(x, gamma, beta, w1, b1, w2, b2, *,
                                 force_tile_len=None):
  """x: (B, L, L, C).  Returns 0.5 * (y + y^T) with y = x + FF(LN(x))."""
  B, L, L2, C = x.shape
  assert L == L2
  H = w1.shape[1]
  itemsize = jnp.dtype(x.dtype).itemsize

  budget, vmem_limit = _vmem_budget_and_limit()
  TL = (force_tile_len if force_tile_len is not None
        else _pick_tile_len(L, C, H, itemsize, budget))
  assert L % TL == 0 and (TL % 8 == 0 or TL == L)
  T = L // TL

  gamma2 = gamma.reshape(1, C)
  beta2 = beta.reshape(1, C)
  b1_2 = b1.reshape(1, H)
  b2_2 = b2.reshape(1, C)

  rows = B * L * L
  cost = pl.CostEstimate(
      flops=rows * 4 * C * H,                  # LN + FF runs once per row
      transcendentals=rows,                    # one rsqrt per row
      bytes_accessed=2 * rows * C * itemsize,  # ~1 read pass + 1 write pass
  )

  if T == 1:
    blk = (1, L, L, C)
    return pl.pallas_call(
        _full_block_kernel,
        out_shape=jax.ShapeDtypeStruct((B, L, L, C), x.dtype),
        grid=(B,),
        in_specs=[
            pl.BlockSpec(blk, lambda b: (b, 0, 0, 0)),
            pl.BlockSpec((1, C), lambda b: (0, 0)),
            pl.BlockSpec((1, C), lambda b: (0, 0)),
            pl.BlockSpec((C, H), lambda b: (0, 0)),
            pl.BlockSpec((1, H), lambda b: (0, 0)),
            pl.BlockSpec((H, C), lambda b: (0, 0)),
            pl.BlockSpec((1, C), lambda b: (0, 0)),
        ],
        out_specs=pl.BlockSpec(blk, lambda b: (b, 0, 0, 0)),
        compiler_params=pltpu.CompilerParams(
            dimension_semantics=("parallel",),
            vmem_limit_bytes=vmem_limit),
        cost_estimate=cost,
    )(x, gamma2, beta2, w1, b1_2, w2, b2_2)

  # -------- tiled triangular-pair path (T > 1) --------
  pairs = [(i, j) for i in range(T) for j in range(i, T)]
  P = len(pairs)                                     # T * (T + 1) / 2
  i_list = jnp.asarray(np.array([p[0] for p in pairs], dtype=np.int32))
  j_list = jnp.asarray(np.array([p[1] for p in pairs], dtype=np.int32))

  # Put the larger parallel extent first so the v7x megacore split stays
  # balanced even for B == 1.  The s axis (sequential scratch carry) stays last.
  if P >= B:
    grid = (P, B, 2)
    unpack = lambda a0, a1: (a1, a0)                 # -> (b, p)
  else:
    grid = (B, P, 2)
    unpack = lambda a0, a1: (a0, a1)

  def xij_map(a0, a1, s, il, jl):
    b, p = unpack(a0, a1)
    return (b, il[p], jl[p], 0)

  def xji_map(a0, a1, s, il, jl):
    b, p = unpack(a0, a1)
    return (b, jl[p], il[p], 0)

  def out_map(a0, a1, s, il, jl):
    b, p = unpack(a0, a1)
    bi = il[p] * (1 - s) + jl[p] * s                 # (i, j) at s==0, (j, i) at s==1
    bj = jl[p] * (1 - s) + il[p] * s
    return (b, bi, bj, 0)

  def bcast_map(a0, a1, s, il, jl):
    return (0, 0)

  blk = (1, TL, TL, C)
  grid_spec = pltpu.PrefetchScalarGridSpec(
      num_scalar_prefetch=2,
      grid=grid,
      in_specs=[
          pl.BlockSpec(blk, xij_map),
          pl.BlockSpec(blk, xji_map),
          pl.BlockSpec((1, C), bcast_map),
          pl.BlockSpec((1, C), bcast_map),
          pl.BlockSpec((C, H), bcast_map),
          pl.BlockSpec((1, H), bcast_map),
          pl.BlockSpec((H, C), bcast_map),
          pl.BlockSpec((1, C), bcast_map),
      ],
      out_specs=pl.BlockSpec(blk, out_map),
      scratch_shapes=[pltpu.VMEM((2, TL, TL, C), jnp.float32)],
  )
  return pl.pallas_call(
      _pair_kernel,
      out_shape=jax.ShapeDtypeStruct((B, L, L, C), x.dtype),
      grid_spec=grid_spec,
      compiler_params=pltpu.CompilerParams(
          dimension_semantics=("parallel", "parallel", "arbitrary"),
          vmem_limit_bytes=vmem_limit),
      cost_estimate=cost,
  )(i_list, j_list, x, x, gamma2, beta2, w1, b1_2, w2, b2_2)


# ---------------------------------------------------------------------------
# Pure-JAX reference (eval-mode dropout) and smoke tests.
# ---------------------------------------------------------------------------
def _reference(x, gamma, beta, w1, b1, w2, b2):
  B, L, _, C = x.shape
  xf = x.reshape(B, L * L, C).astype(jnp.float32)
  mean = jnp.mean(xf, axis=-1, keepdims=True)
  var = jnp.mean((xf - mean) ** 2, axis=-1, keepdims=True)
  xn = (xf - mean) / jnp.sqrt(var + LN_EPS) * gamma + beta
  h = jnp.maximum(
      jnp.dot(xn, w1, precision=jax.lax.Precision.HIGHEST) + b1, 0.0)
  out = jnp.dot(h, w2, precision=jax.lax.Precision.HIGHEST) + b2
  y = (xf + out).reshape(B, L, L, C)
  return 0.5 * (y + jnp.swapaxes(y, 1, 2))


if __name__ == "__main__":
  key = jax.random.PRNGKey(0)
  kx1, kx2, k1, k2, k3, k4 = jax.random.split(key, 6)

  C, H = 32, 64                      # in_channels=32, ff_hidden_dim=64
  gamma = jnp.ones((C,), jnp.float32)
  beta = jnp.zeros((C,), jnp.float32)
  w1 = jax.random.normal(k1, (C, H), dtype=jnp.float32) * 0.05
  b1 = jax.random.normal(k2, (H,), dtype=jnp.float32) * 0.05
  w2 = jax.random.normal(k3, (H, C), dtype=jnp.float32) * 0.05
  b2 = jax.random.normal(k4, (C,), dtype=jnp.float32) * 0.05

  # Case 1: small L -> single full-block kernel (T == 1).
  x1 = jax.random.normal(kx1, (2, 8, 8, C), dtype=jnp.float32)
  out1 = jax.block_until_ready(
      iterative_refinement_forward(x1, gamma, beta, w1, b1, w2, b2))
  ref1 = _reference(x1, gamma, beta, w1, b1, w2, b2)
  assert out1.shape == x1.shape
  assert jnp.allclose(out1, ref1, atol=1e-3, rtol=1e-3), "T==1 path mismatch"

  # Case 2: force TL < L so the triangular-pair path (T == 2, 3 pairs) is
  # exercised, including the off-diagonal mirrored writes.
  x2 = jax.random.normal(kx2, (2, 16, 16, C), dtype=jnp.float32)
  out2 = jax.block_until_ready(
      iterative_refinement_forward(x2, gamma, beta, w1, b1, w2, b2,
                                   force_tile_len=8))
  ref2 = _reference(x2, gamma, beta, w1, b1, w2, b2)
  assert out2.shape == x2.shape
  assert jnp.allclose(out2, ref2, atol=1e-3, rtol=1e-3), "tiled path mismatch"

  print("KERNEL_OK")
</pallas_src>

<mosaic_0001>
module attributes {stable_mosaic.version = 11 : i64} {
  func.func @_full_block_kernel(%arg0: i32, %arg1: memref<1x8x8x32xf32, #tpu.memory_space<vmem>>, %arg2: memref<1x32xf32, #tpu.memory_space<vmem>>, %arg3: memref<1x32xf32, #tpu.memory_space<vmem>>, %arg4: memref<32x64xf32, #tpu.memory_space<vmem>>, %arg5: memref<1x64xf32, #tpu.memory_space<vmem>>, %arg6: memref<64x32xf32, #tpu.memory_space<vmem>>, %arg7: memref<1x32xf32, #tpu.memory_space<vmem>>, %arg8: memref<1x8x8x32xf32, #tpu.memory_space<vmem>>) attributes {dimension_semantics = [#tpu.dimension_semantics<parallel>], iteration_bounds = array<i64: 2>, scalar_prefetch = 0 : i64, scratch_operands = 0 : i64, tpu.core_type = #tpu.core_type<tc>, window_params = [{transform_indices = @transform_0, window_bounds = array<i64: 1, 8, 8, 32>}, {pipeline_mode = #tpu.pipeline_mode<synchronous>, transform_indices = @transform_1, window_bounds = array<i64: 1, 32>}, {pipeline_mode = #tpu.pipeline_mode<synchronous>, transform_indices = @transform_2, window_bounds = array<i64: 1, 32>}, {pipeline_mode = #tpu.pipeline_mode<synchronous>, transform_indices = @transform_3, window_bounds = array<i64: 32, 64>}, {pipeline_mode = #tpu.pipeline_mode<synchronous>, transform_indices = @transform_4, window_bounds = array<i64: 1, 64>}, {pipeline_mode = #tpu.pipeline_mode<synchronous>, transform_indices = @transform_5, window_bounds = array<i64: 64, 32>}, {pipeline_mode = #tpu.pipeline_mode<synchronous>, transform_indices = @transform_6, window_bounds = array<i64: 1, 32>}, {transform_indices = @transform_7, window_bounds = array<i64: 1, 8, 8, 32>}]} {
    %c0 = arith.constant 0 : index
    %c0_0 = arith.constant 0 : index
    %c0_1 = arith.constant 0 : index
    %c0_2 = arith.constant 0 : index
    %0 = vector.load %arg1[%c0, %c0_0, %c0_1, %c0_2] : memref<1x8x8x32xf32, #tpu.memory_space<vmem>>, vector<1x8x8x32xf32>
    %1 = vector.shape_cast %0 : vector<1x8x8x32xf32> to vector<64x32xf32>
    %c0_3 = arith.constant 0 : index
    %c0_4 = arith.constant 0 : index
    %2 = vector.load %arg2[%c0_3, %c0_4] : memref<1x32xf32, #tpu.memory_space<vmem>>, vector<1x32xf32>
    %c0_5 = arith.constant 0 : index
    %c0_6 = arith.constant 0 : index
    %3 = vector.load %arg3[%c0_5, %c0_6] : memref<1x32xf32, #tpu.memory_space<vmem>>, vector<1x32xf32>
    %c0_7 = arith.constant 0 : index
    %c0_8 = arith.constant 0 : index
    %4 = vector.load %arg4[%c0_7, %c0_8] : memref<32x64xf32, #tpu.memory_space<vmem>>, vector<32x64xf32>
    %c0_9 = arith.constant 0 : index
    %c0_10 = arith.constant 0 : index
    %5 = vector.load %arg5[%c0_9, %c0_10] : memref<1x64xf32, #tpu.memory_space<vmem>>, vector<1x64xf32>
    %c0_11 = arith.constant 0 : index
    %c0_12 = arith.constant 0 : index
    %6 = vector.load %arg6[%c0_11, %c0_12] : memref<64x32xf32, #tpu.memory_space<vmem>>, vector<64x32xf32>
    %c0_13 = arith.constant 0 : index
    %c0_14 = arith.constant 0 : index
    %7 = vector.load %arg7[%c0_13, %c0_14] : memref<1x32xf32, #tpu.memory_space<vmem>>, vector<1x32xf32>
    %cst = arith.constant dense<0.000000e+00> : vector<64xf32>
    %8 = vector.multi_reduction <add>, %1, %cst [1] : vector<64x32xf32> to vector<64xf32>
    %9 = vector.shape_cast %8 : vector<64xf32> to vector<64x1xf32>
    %cst_15 = arith.constant 3.200000e+01 : f32
    %10 = vector.broadcast %cst_15 : f32 to vector<64x1xf32>
    %11 = arith.divf %9, %10 : vector<64x1xf32>
    %12 = vector.broadcast %11 : vector<64x1xf32> to vector<64x32xf32>
    %13 = arith.subf %1, %12 : vector<64x32xf32>
    %14 = arith.mulf %13, %13 : vector<64x32xf32>
    %cst_16 = arith.constant dense<0.000000e+00> : vector<64xf32>
    %15 = vector.multi_reduction <add>, %14, %cst_16 [1] : vector<64x32xf32> to vector<64xf32>
    %16 = vector.shape_cast %15 : vector<64xf32> to vector<64x1xf32>
    %cst_17 = arith.constant 3.200000e+01 : f32
    %17 = vector.broadcast %cst_17 : f32 to vector<64x1xf32>
    %18 = arith.divf %16, %17 : vector<64x1xf32>
    %cst_18 = arith.constant 9.99999974E-6 : f32
    %19 = vector.broadcast %cst_18 : f32 to vector<64x1xf32>
    %20 = arith.addf %18, %19 : vector<64x1xf32>
    %21 = math.rsqrt %20 : vector<64x1xf32>
    %22 = vector.broadcast %21 : vector<64x1xf32> to vector<64x32xf32>
    %23 = arith.mulf %13, %22 : vector<64x32xf32>
    %24 = vector.broadcast %2 : vector<1x32xf32> to vector<64x32xf32>
    %25 = arith.mulf %23, %24 : vector<64x32xf32>
    %26 = vector.broadcast %3 : vector<1x32xf32> to vector<64x32xf32>
    %27 = arith.addf %25, %26 : vector<64x32xf32>
    %cst_19 = arith.constant dense<0.000000e+00> : vector<64x64xf32>
    %28 = tpu.matmul %27, %4, %cst_19 {dimension_numbers = #tpu.dot_dimension_numbers<[1], [0], [0], [1], [0, 0, 1, 1], [], []>} : vector<64x32xf32>, vector<32x64xf32>, vector<64x64xf32> -> vector<64x64xf32>
    %29 = vector.broadcast %5 : vector<1x64xf32> to vector<64x64xf32>
    %30 = arith.addf %28, %29 : vector<64x64xf32>
    %cst_20 = arith.constant 0.000000e+00 : f32
    %31 = vector.broadcast %cst_20 : f32 to vector<64x64xf32>
    %32 = arith.maximumf %30, %31 : vector<64x64xf32>
    %cst_21 = arith.constant dense<0.000000e+00> : vector<64x32xf32>
    %33 = tpu.matmul %32, %6, %cst_21 {dimension_numbers = #tpu.dot_dimension_numbers<[1], [0], [0], [1], [0, 0, 1, 1], [], []>} : vector<64x64xf32>, vector<64x32xf32>, vector<64x32xf32> -> vector<64x32xf32>
    %34 = vector.broadcast %7 : vector<1x32xf32> to vector<64x32xf32>
    %35 = arith.addf %33, %34 : vector<64x32xf32>
    %36 = arith.addf %1, %35 : vector<64x32xf32>
    %37 = vector.shape_cast %36 : vector<64x32xf32> to vector<8x8x32xf32>
    %38 = tpu.transpose %37, [1, 0, 2] : vector<8x8x32xf32> -> vector<8x8x32xf32>
    %39 = arith.addf %37, %38 : vector<8x8x32xf32>
    %cst_22 = arith.constant 5.000000e-01 : f32
    %40 = vector.broadcast %cst_22 : f32 to vector<8x8x32xf32>
    %41 = arith.mulf %40, %39 : vector<8x8x32xf32>
    %42 = vector.shape_cast %41 : vector<8x8x32xf32> to vector<1x8x8x32xf32>
    %c0_23 = arith.constant 0 : index
    %c0_24 = arith.constant 0 : index
    %c0_25 = arith.constant 0 : index
    %c0_26 = arith.constant 0 : index
    %43 = vector.load %arg8[%c0_23, %c0_24, %c0_25, %c0_26] : memref<1x8x8x32xf32, #tpu.memory_space<vmem>>, vector<1x8x8x32xf32>
    tpu.vector_store %arg8[%c0_23, %c0_24, %c0_25, %c0_26], %42 {strides = array<i32>} : memref<1x8x8x32xf32, #tpu.memory_space<vmem>>, vector<1x8x8x32xf32>,
    return
  }
  func.func @transform_0(%arg0: i32) -> (i32, i32, i32, i32) {
    %c0_i32 = arith.constant 0 : i32
    %c0_i32_0 = arith.constant 0 : i32
    %c0_i32_1 = arith.constant 0 : i32
    %c0_i32_2 = arith.constant 0 : i32
    return %arg0, %c0_i32, %c0_i32_0, %c0_i32_1 : i32, i32, i32, i32
  }
  func.func @transform_1(%arg0: i32) -> (i32, i32) {
    %c0_i32 = arith.constant 0 : i32
    %c0_i32_0 = arith.constant 0 : i32
    %c0_i32_1 = arith.constant 0 : i32
    return %c0_i32, %c0_i32_0 : i32, i32
  }
  func.func @transform_2(%arg0: i32) -> (i32, i32) {
    %c0_i32 = arith.constant 0 : i32
    %c0_i32_0 = arith.constant 0 : i32
    %c0_i32_1 = arith.constant 0 : i32
    return %c0_i32, %c0_i32_0 : i32, i32
  }
  func.func @transform_3(%arg0: i32) -> (i32, i32) {
    %c0_i32 = arith.constant 0 : i32
    %c0_i32_0 = arith.constant 0 : i32
    %c0_i32_1 = arith.constant 0 : i32
    return %c0_i32, %c0_i32_0 : i32, i32
  }
  func.func @transform_4(%arg0: i32) -> (i32, i32) {
    %c0_i32 = arith.constant 0 : i32
    %c0_i32_0 = arith.constant 0 : i32
    %c0_i32_1 = arith.constant 0 : i32
    return %c0_i32, %c0_i32_0 : i32, i32
  }
  func.func @transform_5(%arg0: i32) -> (i32, i32) {
    %c0_i32 = arith.constant 0 : i32
    %c0_i32_0 = arith.constant 0 : i32
    %c0_i32_1 = arith.constant 0 : i32
    return %c0_i32, %c0_i32_0 : i32, i32
  }
  func.func @transform_6(%arg0: i32) -> (i32, i32) {
    %c0_i32 = arith.constant 0 : i32
    %c0_i32_0 = arith.constant 0 : i32
    %c0_i32_1 = arith.constant 0 : i32
    return %c0_i32, %c0_i32_0 : i32, i32
  }
  func.func @transform_7(%arg0: i32) -> (i32, i32, i32, i32) {
    %c0_i32 = arith.constant 0 : i32
    %c0_i32_0 = arith.constant 0 : i32
    %c0_i32_1 = arith.constant 0 : i32
    %c0_i32_2 = arith.constant 0 : i32
    return %arg0, %c0_i32, %c0_i32_0, %c0_i32_1 : i32, i32, i32, i32
  }
}

</mosaic_0001>

<llo_original>
// kernel: iterative_refinement_forward.1
$region0: #{iterative_refinement_forward.1}
  #allocation0 [shape = 'u32[]', space=smem, size = 0x4, offset = 0x4, fixed_abs, tag = 'smem constant byte address 0x4 - core index']
  #allocation1 [shape = 'u32[144,128]{1,0:T(1,128)}', space=vmem, size = 0x12000, scoped, tag = 'internal scratch']
  %s0 = inlined_call_operand.hbm [shape: f32[2,8,8,32], index: 0, kind: input, shape index: {}]
  %s1 = inlined_call_operand.vmem [shape: f32[1,32], index: 1, kind: input, shape index: {}]
  %s2 = inlined_call_operand.vmem [shape: f32[1,32], index: 2, kind: input, shape index: {}]
  %s3 = inlined_call_operand.vmem [shape: f32[32,64], index: 3, kind: input, shape index: {}]
  %s4 = inlined_call_operand.vmem [shape: f32[1,64], index: 4, kind: input, shape index: {}]
  %s5 = inlined_call_operand.vmem [shape: f32[64,32], index: 5, kind: input, shape index: {}]
  %s6 = inlined_call_operand.vmem [shape: f32[1,32], index: 6, kind: input, shape index: {}]
  %s7 = inlined_call_operand.hbm [shape: f32[2,8,8,32], index: 7, kind: output, shape index: {}]
  %s8 = sld [smem:[#allocation0]]
  $region65: #{iterative_refinement_forward.1} parent=0
    _
  %s10 = ssub.s32 1, %s8
  %s11 = scalar_select 0, %s10, %s8
  $region1: #{iterative_refinement_forward.1} parent=0
    #allocation2 [shape = 'u8[65536]{0}', space=vmem, size = 0x10000, scoped, tag = 'input window, operand 0']
    #allocation3 [shape = 's32[2]{0}', space=sflag, size = 0x8, scoped, tag = 'scoped memory for iterative_refinement_forward.1']
    #allocation4 [shape = 's32[2]{0}', space=sflag, size = 0x8, scoped, tag = 'scoped memory for iterative_refinement_forward.1']
    #allocation5 [shape = 'u8[65536]{0}', space=vmem, size = 0x10000, scoped, tag = 'output window, operand 0']
    %12 = vsyncpa [#allocation3], 0
    %s13 = scalar_lea.sflag [#allocation3], 1
    %14 = vsyncpa %s13, 0
    %15 = vsyncpa [#allocation4], 0
    %s16 = scalar_lea.sflag [#allocation4], 1
    %17 = vsyncpa %s16, 0
    loop: start=0, step=1, limit=4
    $region2: #{iterative_refinement_forward.1} parent=1 // loop_pre_header
      _
    $region3: #{iterative_refinement_forward.1} parent=1 // loop_header
      %s19 = sphi 0, %s23
      %p20 = scmp.ge.s32.totalorder %s19, 4
      %s29 = sphi 0, %s31
      %s32 = sphi 0, %s29
      %s33 = sphi 0, %s32
      %s49 = sphi 0, %s33
      %s53 = sphi 0, %s53
      %s55 = sphi 0, %s53
      %s56 = sphi 0, %s55
      %s70 = sphi 0, %s56
      %s74 = sphi 0, %s74
      %s76 = sphi 0, %s74
      %s77 = sphi 0, %s76
      %s91 = sphi 0, %s77
      %s95 = sphi 0, %s95
      %s97 = sphi 0, %s95
      %s98 = sphi 0, %s97
      %s112 = sphi 0, %s98
      %s116 = sphi 0, %s116
      %s118 = sphi 0, %s116
      %s119 = sphi 0, %s118
      %s133 = sphi 0, %s119
      %s137 = sphi 0, %s137
      %s139 = sphi 0, %s137
      %s140 = sphi 0, %s139
      %s154 = sphi 0, %s140
      %s158 = sphi 0, %s158
      %s160 = sphi 0, %s158
      %s161 = sphi 0, %s160
      %s175 = sphi 0, %s161
      %s181 = sphi 0, %s183
      %s184 = sphi 0, %s181
      %s185 = sphi 0, %s184
      %s201 = sphi 0, %s185
    $region4: #{iterative_refinement_forward.1} parent=1 // loop_header_branch
      %22 = sbr.rel (%p20) target = $region8
    $region5: #{iterative_refinement_forward.1} parent=1 // loop_body
      %s24 = ssub.s32 %s19, 1
      %s25 = ssub.s32 %s19, 2
      %s26 = sadd.s32 %s19, 1
      %s27 = ssub.s32 %s19, %s26
      %p28 = scmp.eq.s32.totalorder %s27, 0
      %s30 = sadd.s32 %s29, 1
      %s31 = scalar_select %p28, %s29, %s30
      %p34 = pneg %p28
      %p35 = scmp.eq.s32.totalorder %s19, 1
      %p36 = por %p34, %p35
      %p37 = scmp.ne.s32.totalorder %s29, %s32
      %p38 = scmp.eq.s32.totalorder %s19, 0
      %p39 = por %p37, %p38
      %p40 = scmp.ne.s32.totalorder %s29, %s32
      %p41 = scmp.eq.s32.totalorder %s24, 1
      %p42 = por %p40, %p41
      %p43 = scmp.ne.s32.totalorder %s32, %s33
      %p44 = scmp.eq.s32.totalorder %s24, 0
      %p45 = por %p43, %p44
      %p46 = scmp.ne.s32.totalorder %s32, %s33
      %p47 = scmp.eq.s32.totalorder %s25, 1
      %p48 = por %p46, %p47
      %p50 = scmp.ne.s32.totalorder %s33, %s49
      %p51 = scmp.eq.s32.totalorder %s25, 0
      %p52 = por %p50, %p51
      %s54 = sadd.s32 %s53, 1
      %p57 = scmp.eq.s32.totalorder %s19, 1
      %p58 = scmp.ne.s32.totalorder %s53, %s55
      %p59 = scmp.eq.s32.totalorder %s19, 0
      %p60 = por %p58, %p59
      %p61 = scmp.ne.s32.totalorder %s53, %s55
      %p62 = scmp.eq.s32.totalorder %s24, 1
      %p63 = por %p61, %p62
      %p64 = scmp.ne.s32.totalorder %s55, %s56
      %p65 = scmp.eq.s32.totalorder %s24, 0
      %p66 = por %p64, %p65
      %p67 = scmp.ne.s32.totalorder %s55, %s56
      %p68 = scmp.eq.s32.totalorder %s25, 1
      %p69 = por %p67, %p68
      %p71 = scmp.ne.s32.totalorder %s56, %s70
      %p72 = scmp.eq.s32.totalorder %s25, 0
      %p73 = por %p71, %p72
      %s75 = sadd.s32 %s74, 1
      %p78 = scmp.eq.s32.totalorder %s19, 1
      %p79 = scmp.ne.s32.totalorder %s74, %s76
      %p80 = scmp.eq.s32.totalorder %s19, 0
      %p81 = por %p79, %p80
      %p82 = scmp.ne.s32.totalorder %s74, %s76
      %p83 = scmp.eq.s32.totalorder %s24, 1
      %p84 = por %p82, %p83
      %p85 = scmp.ne.s32.totalorder %s76, %s77
      %p86 = scmp.eq.s32.totalorder %s24, 0
      %p87 = por %p85, %p86
      %p88 = scmp.ne.s32.totalorder %s76, %s77
      %p89 = scmp.eq.s32.totalorder %s25, 1
      %p90 = por %p88, %p89
      %p92 = scmp.ne.s32.totalorder %s77, %s91
      %p93 = scmp.eq.s32.totalorder %s25, 0
      %p94 = por %p92, %p93
      %s96 = sadd.s32 %s95, 1
      %p99 = scmp.eq.s32.totalorder %s19, 1
      %p100 = scmp.ne.s32.totalorder %s95, %s97
      %p101 = scmp.eq.s32.totalorder %s19, 0
      %p102 = por %p100, %p101
      %p103 = scmp.ne.s32.totalorder %s95, %s97
      %p104 = scmp.eq.s32.totalorder %s24, 1
      %p105 = por %p103, %p104
      %p106 = scmp.ne.s32.totalorder %s97, %s98
      %p107 = scmp.eq.s32.totalorder %s24, 0
      %p108 = por %p106, %p107
      %p109 = scmp.ne.s32.totalorder %s97, %s98
      %p110 = scmp.eq.s32.totalorder %s25, 1
      %p111 = por %p109, %p110
      %p113 = scmp.ne.s32.totalorder %s98, %s112
      %p114 = scmp.eq.s32.totalorder %s25, 0
      %p115 = por %p113, %p114
      %s117 = sadd.s32 %s116, 1
      %p120 = scmp.eq.s32.totalorder %s19, 1
      %p121 = scmp.ne.s32.totalorder %s116, %s118
      %p122 = scmp.eq.s32.totalorder %s19, 0
      %p123 = por %p121, %p122
      %p124 = scmp.ne.s32.totalorder %s116, %s118
      %p125 = scmp.eq.s32.totalorder %s24, 1
      %p126 = por %p124, %p125
      %p127 = scmp.ne.s32.totalorder %s118, %s119
      %p128 = scmp.eq.s32.totalorder %s24, 0
      %p129 = por %p127, %p128
      %p130 = scmp.ne.s32.totalorder %s118, %s119
      %p131 = scmp.eq.s32.totalorder %s25, 1
      %p132 = por %p130, %p131
      %p134 = scmp.ne.s32.totalorder %s119, %s133
      %p135 = scmp.eq.s32.totalorder %s25, 0
      %p136 = por %p134, %p135
      %s138 = sadd.s32 %s137, 1
      %p141 = scmp.eq.s32.totalorder %s19, 1
      %p142 = scmp.ne.s32.totalorder %s137, %s139
      %p143 = scmp.eq.s32.totalorder %s19, 0
      %p144 = por %p142, %p143
      %p145 = scmp.ne.s32.totalorder %s137, %s139
      %p146 = scmp.eq.s32.totalorder %s24, 1
      %p147 = por %p145, %p146
      %p148 = scmp.ne.s32.totalorder %s139, %s140
      %p149 = scmp.eq.s32.totalorder %s24, 0
      %p150 = por %p148, %p149
      %p151 = scmp.ne.s32.totalorder %s139, %s140
      %p152 = scmp.eq.s32.totalorder %s25, 1
      %p153 = por %p151, %p152
      %p155 = scmp.ne.s32.totalorder %s140, %s154
      %p156 = scmp.eq.s32.totalorder %s25, 0
      %p157 = por %p155, %p156
      %s159 = sadd.s32 %s158, 1
      %p162 = scmp.eq.s32.totalorder %s19, 1
      %p163 = scmp.ne.s32.totalorder %s158, %s160
      %p164 = scmp.eq.s32.totalorder %s19, 0
      %p165 = por %p163, %p164
      %p166 = scmp.ne.s32.totalorder %s158, %s160
      %p167 = scmp.eq.s32.totalorder %s24, 1
      %p168 = por %p166, %p167
      %p169 = scmp.ne.s32.totalorder %s160, %s161
      %p170 = scmp.eq.s32.totalorder %s24, 0
      %p171 = por %p169, %p170
      %p172 = scmp.ne.s32.totalorder %s160, %s161
      %p173 = scmp.eq.s32.totalorder %s25, 1
      %p174 = por %p172, %p173
      %p176 = scmp.ne.s32.totalorder %s161, %s175
      %p177 = scmp.eq.s32.totalorder %s25, 0
      %p178 = por %p176, %p177
      %s179 = ssub.s32 %s19, %s26
      %p180 = scmp.eq.s32.totalorder %s179, 0
      %s182 = sadd.s32 %s181, 1
      %s183 = scalar_select %p180, %s181, %s182
      %p186 = pneg %p180
      %p187 = scmp.eq.s32.totalorder %s19, 1
      %p188 = por %p186, %p187
      %p189 = scmp.ne.s32.totalorder %s181, %s184
      %p190 = scmp.eq.s32.totalorder %s19, 0
      %p191 = por %p189, %p190
      %p192 = scmp.ne.s32.totalorder %s181, %s184
      %p193 = scmp.eq.s32.totalorder %s24, 1
      %p194 = por %p192, %p193
      %p195 = scmp.ne.s32.totalorder %s184, %s185
      %p196 = scmp.eq.s32.totalorder %s24, 0
      %p197 = por %p195, %p196
      %p198 = scmp.ne.s32.totalorder %s184, %s185
      %p199 = scmp.eq.s32.totalorder %s25, 1
      %p200 = por %p198, %p199
      %p202 = scmp.ne.s32.totalorder %s185, %s201
      %p203 = scmp.eq.s32.totalorder %s25, 0
      %p204 = por %p202, %p203
      %p205 = scmp.le.s32.totalorder 1, %s19
      %p206 = scmp.lt.s32.totalorder %s19, 3
      %p207 = pnand %p205, %p206
      %p208 = pneg %p207
      // Predicated region
      $region9: #{iterative_refinement_forward.1} parent=5 // pred_check
        _
      $region10: #{iterative_refinement_forward.1} parent=5 // pred_check_branch
        %210 = sbr.rel (%p207) target = $region12
      $region11: #{iterative_refinement_forward.1} parent=5 // pred_region
        %s211 = ssub.s32 %s19, 1
        // Predicated region
        $region13: #{iterative_refinement_forward.1} parent=11 // pred_check
          %p212 = pneg %p66
        $region14: #{iterative_refinement_forward.1} parent=11 // pred_check_branch
          %214 = sbr.rel (%p212) target = $region16
        $region15: #{iterative_refinement_forward.1} parent=11 // pred_region
          _
        $region16: #{iterative_refinement_forward.1} parent=11 // pred_fallthru
          _
        // Predicated region
        $region17: #{iterative_refinement_forward.1} parent=11 // pred_check
          %p215 = pneg %p87
        $region18: #{iterative_refinement_forward.1} parent=11 // pred_check_branch
          %217 = sbr.rel (%p215) target = $region20
        $region19: #{iterative_refinement_forward.1} parent=11 // pred_region
          _
        $region20: #{iterative_refinement_forward.1} parent=11 // pred_fallthru
          _
        // Predicated region
        $region21: #{iterative_refinement_forward.1} parent=11 // pred_check
          %p218 = pneg %p108
        $region22: #{iterative_refinement_forward.1} parent=11 // pred_check_branch
          %220 = sbr.rel (%p218) target = $region24
        $region23: #{iterative_refinement_forward.1} parent=11 // pred_region
          _
        $region24: #{iterative_refinement_forward.1} parent=11 // pred_fallthru
          _
        // Predicated region
        $region25: #{iterative_refinement_forward.1} parent=11 // pred_check
          %p221 = pneg %p129
        $region26: #{iterative_refinement_forward.1} parent=11 // pred_check_branch
          %223 = sbr.rel (%p221) target = $region28
        $region27: #{iterative_refinement_forward.1} parent=11 // pred_region
          _
        $region28: #{iterative_refinement_forward.1} parent=11 // pred_fallthru
          _
        // Predicated region
        $region29: #{iterative_refinement_forward.1} parent=11 // pred_check
          %p224 = pneg %p150
        $region30: #{iterative_refinement_forward.1} parent=11 // pred_check_branch
          %226 = sbr.rel (%p224) target = $region32
        $region31: #{iterative_refinement_forward.1} parent=11 // pred_region
          _
        $region32: #{iterative_refinement_forward.1} parent=11 // pred_fallthru
          _
        // Predicated region
        $region33: #{iterative_refinement_forward.1} parent=11 // pred_check
          %p227 = pneg %p171
        $region34: #{iterative_refinement_forward.1} parent=11 // pred_check_branch
          %229 = sbr.rel (%p227) target = $region36
        $region35: #{iterative_refinement_forward.1} parent=11 // pred_region
          _
        $region36: #{iterative_refinement_forward.1} parent=11 // pred_fallthru
          _
      $region12: #{iterative_refinement_forward.1} parent=5 // pred_fallthru
        _
      %p230 = scmp.lt.s32.totalorder %s19, 2
      // Predicated region
      $region37: #{iterative_refinement_forward.1} parent=5 // pred_check
        %p231 = pneg %p230
      $region38: #{iterative_refinement_forward.1} parent=5 // pred_check_branch
        %233 = sbr.rel (%p231) target = $region40
      $region39: #{iterative_refinement_forward.1} parent=5 // pred_region
        // Predicated region
        $region41: #{iterative_refinement_forward.1} parent=39 // pred_check
          %p234 = pneg %p39
        $region42: #{iterative_refinement_forward.1} parent=39 // pred_check_branch
          %236 = sbr.rel (%p234) target = $region44
        $region43: #{iterative_refinement_forward.1} parent=39 // pred_region
          %s237 = sand.u32 %s29, 1
          %s238 = scalar_lea.sflag [#allocation3], %s237
          %s239 = sand.u32 %s29, 1
          %s240 = smul.addr %s239, 64
          %s241 = scalar_lea.vmem [#allocation2], %s240
          %s243 = ssub.s32 1024, 1024
          %244 = vsyncadd %s238, %s243
          %s245 = smul.addr %s19, 8
          %s246 = smul.addr %s245, 128
          %s247 = scalar_lea.hbm %s0, %s246
          %s248 = sshll.u32 %s241, 4
          %s249 = int_to_ptr.vmem [resolvable:$true] %s248
          %254 = dma.hbm_to_vmem [thread:$0]  %s247, 1024, %s249, %s238, 128, 128, 8
        $region44: #{iterative_refinement_forward.1} parent=39 // pred_fallthru
          _
      $region40: #{iterative_refinement_forward.1} parent=5 // pred_fallthru
        _
      %p255 = scmp.le.s32.totalorder 1, %s19
      %p256 = scmp.lt.s32.totalorder %s19, 3
      %p257 = pnand %p255, %p256
      %p258 = pneg %p257
      // Predicated region
      $region45: #{iterative_refinement_forward.1} parent=5 // pred_check
        _
      $region46: #{iterative_refinement_forward.1} parent=5 // pred_check_branch
        %260 = sbr.rel (%p257) target = $region48
      $region47: #{iterative_refinement_forward.1} parent=5 // pred_region
        %s261 = ssub.s32 %s19, 1
        %s262 = sand.u32 %s32, 1
        %s263 = scalar_lea.sflag [#allocation3], %s262
        %s264 = sand.u32 %s32, 1
        %s265 = smul.addr %s264, 64
        %s266 = scalar_lea.vmem [#allocation2], %s265
        // Predicated region
        $region49: #{iterative_refinement_forward.1} parent=47 // pred_check
          %p267 = pneg %p45
        $region50: #{iterative_refinement_forward.1} parent=47 // pred_check_branch
          %269 = sbr.rel (%p267) target = $region52
        $region51: #{iterative_refinement_forward.1} parent=47 // pred_region
          %270 = dma.done %s263, 1024
        $region52: #{iterative_refinement_forward.1} parent=47 // pred_fallthru
          _
        %s271 = sand.u32 %s32, 1
        %s272 = scalar_lea.sflag [#allocation3], %s271
        %s273 = sand.u32 %s32, 1
        %s274 = smul.addr %s273, 64
        %s275 = scalar_lea.vmem [#allocation2], %s274
        %p276 = pneg %p45
        %p277 = pneg %p42
        %p278 = pneg %p66
        %p279 = pneg %p63
        %p280 = pneg %p87
        %p281 = pneg %p84
        %p282 = pneg %p108
        %p283 = pneg %p105
        %p284 = pneg %p129
        %p285 = pneg %p126
        %p286 = pneg %p150
        %p287 = pneg %p147
        %p288 = pneg %p171
        %p289 = pneg %p168
        %p290 = pneg %p197
        %p291 = pneg %p194
        %s292 = sand.u32 %s184, 1
        %s293 = scalar_lea.sflag [#allocation4], %s292
        %s294 = sand.u32 %s184, 1
        %s295 = smul.addr %s294, 64
        %s296 = scalar_lea.vmem [#allocation5], %s295
        %v297 = vld [vmem:[%s266] sm:$0xff]
        %v298 = vld [vmem:[%s266 + $0x8] sm:$0xff]
        %v299 = vld [vmem:[%s266 + $0x10] sm:$0xff]
        %v300 = vld [vmem:[%s266 + $0x18] sm:$0xff]
        %v301 = vld [vmem:[%s266 + $0x20] sm:$0xff]
        %v302 = vld [vmem:[%s266 + $0x28] sm:$0xff]
        %v303 = vld [vmem:[%s266 + $0x30] sm:$0xff]
        %v304 = vld [vmem:[%s266 + $0x38] sm:$0xff]
        %v305 = vld [vmem:[%s1] sm:$0x1]
        %v306 = vld [vmem:[%s2] sm:$0x1]
        %v307 = vld [vmem:[%s3] sm:$0xff]
        %v308 = vld [vmem:[%s3 + $0x8] sm:$0xff]
        %v309 = vld [vmem:[%s3 + $0x10] sm:$0xff]
        %v310 = vld [vmem:[%s3 + $0x18] sm:$0xff]
        %v311 = vld [vmem:[%s4] sm:$0x1]
        %v312 = vld [vmem:[%s5] sm:$0xff]
        %v313 = vld [vmem:[%s5 + $0x8] sm:$0xff]
        %v314 = vld [vmem:[%s5 + $0x10] sm:$0xff]
        %v315 = vld [vmem:[%s5 + $0x18] sm:$0xff]
        %v316 = vld [vmem:[%s5 + $0x20] sm:$0xff]
        %v317 = vld [vmem:[%s5 + $0x28] sm:$0xff]
        %v318 = vld [vmem:[%s5 + $0x30] sm:$0xff]
        %v319 = vld [vmem:[%s5 + $0x38] sm:$0xff]
        %v320 = vld [vmem:[%s6] sm:$0x1]
        %vm321 = vcmask 261120
        %v322 = vsel %vm321, %v297, 0.0
        %323 = vadd.xlane.f32.xlu0 %v322
        %v324 = vpop.xlane.xlu0 %323
        %v325 = vsel %vm321, %v298, 0.0
        %326 = vadd.xlane.f32.xlu0 %v325
        %v327 = vpop.xlane.xlu0 %326
        %v328 = vsel %vm321, %v299, 0.0
        %329 = vadd.xlane.f32.xlu0 %v328
        %v330 = vpop.xlane.xlu0 %329
        %v331 = vsel %vm321, %v300, 0.0
        %332 = vadd.xlane.f32.xlu0 %v331
        %v333 = vpop.xlane.xlu0 %332
        %v334 = vsel %vm321, %v301, 0.0
        %335 = vadd.xlane.f32.xlu0 %v334
        %v336 = vpop.xlane.xlu0 %335
        %v337 = vsel %vm321, %v302, 0.0
        %338 = vadd.xlane.f32.xlu0 %v337
        %v339 = vpop.xlane.xlu0 %338
        %v340 = vsel %vm321, %v303, 0.0
        %341 = vadd.xlane.f32.xlu0 %v340
        %v342 = vpop.xlane.xlu0 %341
        %v343 = vsel %vm321, %v304, 0.0
        %344 = vadd.xlane.f32.xlu0 %v343
        %v345 = vpop.xlane.xlu0 %344
        %v346 = vrcp.pop 32.0
        %v347 = vmul.f32 %v324, %v346
        %v348 = vmul.f32 %v327, %v346
        %v349 = vmul.f32 %v330, %v346
        %v350 = vmul.f32 %v333, %v346
        %v351 = vmul.f32 %v336, %v346
        %v352 = vmul.f32 %v339, %v346
        %v353 = vmul.f32 %v342, %v346
        %v354 = vmul.f32 %v345, %v346
        %v355 = vsub.f32 %v297, %v347
        %v356 = vsub.f32 %v298, %v348
        %v357 = vsub.f32 %v299, %v349
        %v358 = vsub.f32 %v300, %v350
        %v359 = vsub.f32 %v301, %v351
        %v360 = vsub.f32 %v302, %v352
        %v361 = vsub.f32 %v303, %v353
        %v362 = vsub.f32 %v304, %v354
        %v363 = vmul.f32 %v355, %v355
        %v364 = vmul.f32 %v356, %v356
        %v365 = vmul.f32 %v357, %v357
        %v366 = vmul.f32 %v358, %v358
        %v367 = vmul.f32 %v359, %v359
        %v368 = vmul.f32 %v360, %v360
        %v369 = vmul.f32 %v361, %v361
        %v370 = vmul.f32 %v362, %v362
        %v371 = vsel %vm321, %v363, 0.0
        %372 = vadd.xlane.f32.xlu0 %v371
        %v373 = vpop.xlane.xlu0 %372
        %v374 = vsel %vm321, %v364, 0.0
        %375 = vadd.xlane.f32.xlu0 %v374
        %v376 = vpop.xlane.xlu0 %375
        %v377 = vsel %vm321, %v365, 0.0
        %378 = vadd.xlane.f32.xlu0 %v377
        %v379 = vpop.xlane.xlu0 %378
        %v380 = vsel %vm321, %v366, 0.0
        %381 = vadd.xlane.f32.xlu0 %v380
        %v382 = vpop.xlane.xlu0 %381
        %v383 = vsel %vm321, %v367, 0.0
        %384 = vadd.xlane.f32.xlu0 %v383
        %v385 = vpop.xlane.xlu0 %384
        %v386 = vsel %vm321, %v368, 0.0
        %387 = vadd.xlane.f32.xlu0 %v386
        %v388 = vpop.xlane.xlu0 %387
        %v389 = vsel %vm321, %v369, 0.0
        %390 = vadd.xlane.f32.xlu0 %v389
        %v391 = vpop.xlane.xlu0 %390
        %v392 = vsel %vm321, %v370, 0.0
        %393 = vadd.xlane.f32.xlu0 %v392
        %v394 = vpop.xlane.xlu0 %393
        %v395 = vmul.f32 %v373, %v346
        %v396 = vmul.f32 %v376, %v346
        %v397 = vmul.f32 %v379, %v346
        %v398 = vmul.f32 %v382, %v346
        %v399 = vmul.f32 %v385, %v346
        %v400 = vmul.f32 %v388, %v346
        %v401 = vmul.f32 %v391, %v346
        %v402 = vmul.f32 %v394, %v346
        %v403 = vadd.f32 %v395, 1e-05
        %v404 = vadd.f32 %v396, 1e-05
        %v405 = vadd.f32 %v397, 1e-05
        %v406 = vadd.f32 %v398, 1e-05
        %v407 = vadd.f32 %v399, 1e-05
        %v408 = vadd.f32 %v400, 1e-05
        %v409 = vadd.f32 %v401, 1e-05
        %v410 = vadd.f32 %v402, 1e-05
        %v411 = vrsqrt.pop %v403
        %v412 = vrsqrt.pop %v404
        %v413 = vrsqrt.pop %v405
        %v414 = vrsqrt.pop %v406
        %v415 = vrsqrt.pop %v407
        %v416 = vrsqrt.pop %v408
        %v417 = vrsqrt.pop %v409
        %v418 = vrsqrt.pop %v410
        %v419 = vmul.f32 %v355, %v411
        %v420 = vmul.f32 %v356, %v412
        %v421 = vmul.f32 %v357, %v413
        %v422 = vmul.f32 %v358, %v414
        %v423 = vmul.f32 %v359, %v415
        %v424 = vmul.f32 %v360, %v416
        %v425 = vmul.f32 %v361, %v417
        %v426 = vmul.f32 %v362, %v418
        %v428 = vlaneseq
        %v429 = vshrl.u32 %v428, 7
        %v430 = vsub.s32 0, %v429
        %v431 = vrot.slane %v305, %v430
        %v433 = vmul.f32 %v419, %v431
        %v434 = vmul.f32 %v420, %v431
        %v435 = vmul.f32 %v421, %v431
        %v436 = vmul.f32 %v422, %v431
        %v437 = vmul.f32 %v423, %v431
        %v438 = vmul.f32 %v424, %v431
        %v439 = vmul.f32 %v425, %v431
        %v440 = vmul.f32 %v426, %v431
        %v442 = vlaneseq
        %v443 = vshrl.u32 %v442, 7
        %v444 = vsub.s32 0, %v443
        %v445 = vrot.slane %v306, %v444
        %v447 = vadd.f32 %v433, %v445
        %v448 = vadd.f32 %v434, %v445
        %v449 = vadd.f32 %v435, %v445
        %v450 = vadd.f32 %v436, %v445
        %v451 = vadd.f32 %v437, %v445
        %v452 = vadd.f32 %v438, %v445
        %v453 = vadd.f32 %v439, %v445
        %v454 = vadd.f32 %v440, %v445
        %v456 = vlaneseq
        %v457 = vshrl.u32 %v456, 7
        %v458 = vsub.s32 0, %v457
        %v459 = vrot.slane %v311, %v458
        %v462 = vsel %vm321, %v447, 0
        %v465 = vsel %vm321, %v448, 0
        %v468 = vsel %vm321, %v449, 0
        %v471 = vsel %vm321, %v450, 0
        %v474 = vsel %vm321, %v451, 0
        %v477 = vsel %vm321, %v452, 0
        %v480 = vsel %vm321, %v453, 0
        %v483 = vsel %vm321, %v454, 0
        %485 = vmatprep.subr.mxu0 0.0
        %486 = vmatpush1.msra.mxu0 %v307
        %487 = vmatprep.subr.mxu0 0.0
        %488 = vmatpush1.msra.mxu0 %v308
        %489 = vmatprep.subr.mxu0 0.0
        %490 = vmatpush1.msra.mxu0 %v309
        %491 = vmatprep.subr.mxu0 0.0
        %492 = vmatpush1.msra.mxu0 %v310
        %493 = vmatprep.subr.mxu0 0.0
        %494 = vmatpush1.msra.mxu0 0.0
        %495 = vmatprep.subr.mxu0 0.0
        %496 = vmatpush1.msra.mxu0 0.0
        %497 = vmatprep.subr.mxu0 0.0
        %498 = vmatpush1.msra.mxu0 0.0
        %499 = vmatprep.subr.mxu0 0.0
        %500 = vmatpush1.msra.mxu0 0.0
        %501 = vmatprep.subr.mxu0 0.0
        %502 = vmatpush1.msra.mxu0 0.0
        %503 = vmatprep.subr.mxu0 0.0
        %504 = vmatpush1.msra.mxu0 0.0
        %505 = vmatprep.subr.mxu0 0.0
        %506 = vmatpush1.msra.mxu0 0.0
        %507 = vmatprep.subr.mxu0 0.0
        %508 = vmatpush1.msra.mxu0 0.0
        %509 = vmatprep.subr.mxu0 0.0
        %510 = vmatpush1.msra.mxu0 0.0
        %511 = vmatprep.subr.mxu0 0.0
        %512 = vmatpush1.msra.mxu0 0.0
        %513 = vmatprep.subr.mxu0 0.0
        %514 = vmatpush1.msra.mxu0 0.0
        %515 = vmatprep.subr.mxu0 0.0
        %516 = vmatpush1.msra.mxu0 0.0
        %517 = vmatprep.subr.mxu0 0.0
        %518 = vmatpush1.msra.mxu0 0.0
        %519 = vmatprep.subr.mxu0 0.0
        %520 = vmatpush1.msra.mxu0 0.0
        %521 = vmatprep.subr.mxu0 0.0
        %522 = vmatpush1.msra.mxu0 0.0
        %523 = vmatprep.subr.mxu0 0.0
        %524 = vmatpush1.msra.mxu0 0.0
        %525 = vmatprep.subr.mxu0 0.0
        %526 = vmatpush1.msra.mxu0 0.0
        %527 = vmatprep.subr.mxu0 0.0
        %528 = vmatpush1.msra.mxu0 0.0
        %529 = vmatprep.subr.mxu0 0.0
        %530 = vmatpush1.msra.mxu0 0.0
        %531 = vmatprep.subr.mxu0 0.0
        %532 = vmatpush1.msra.mxu0 0.0
        %533 = vmatprep.subr.mxu0 0.0
        %534 = vmatpush1.msra.mxu0 0.0
        %535 = vmatprep.subr.mxu0 0.0
        %536 = vmatpush1.msra.mxu0 0.0
        %537 = vmatprep.subr.mxu0 0.0
        %538 = vmatpush1.msra.mxu0 0.0
        %539 = vmatprep.subr.mxu0 0.0
        %540 = vmatpush1.msra.mxu0 0.0
        %541 = vmatprep.subr.mxu0 0.0
        %542 = vmatpush1.msra.mxu0 0.0
        %543 = vmatprep.subr.mxu0 0.0
        %544 = vmatpush1.msra.mxu0 0.0
        %545 = vmatprep.subr.mxu0 0.0
        %546 = vmatpush1.msra.mxu0 0.0
        %547 = vmatprep.subr.mxu0 0.0
        %548 = vmatpush1.msra.mxu0 0.0
        %549 = vmatprep.mubr.f32.mxu0 0.0
        %550 = vmatmul.mubr.f32.gmra.mrb[0].mxu0 %v462
        %v551 = vpop.f32.mrb[0].mxu0
        %v552 = vadd.f32 %v459, %v551
        %v553 = vpop.f32.mrb[0].mxu0
        %554 = vmatprep.mubr.f32.mxu0 0.0
        %555 = vmatmul.mubr.f32.gmra.mrb[0].mxu0 %v465
        %v556 = vpop.f32.mrb[0].mxu0
        %v557 = vadd.f32 %v459, %v556
        %v558 = vpop.f32.mrb[0].mxu0
        %559 = vmatprep.mubr.f32.mxu0 0.0
        %560 = vmatmul.mubr.f32.gmra.mrb[0].mxu0 %v468
        %v561 = vpop.f32.mrb[0].mxu0
        %v562 = vadd.f32 %v459, %v561
        %v563 = vpop.f32.mrb[0].mxu0
        %564 = vmatprep.mubr.f32.mxu0 0.0
        %565 = vmatmul.mubr.f32.gmra.mrb[0].mxu0 %v471
        %v566 = vpop.f32.mrb[0].mxu0
        %v567 = vadd.f32 %v459, %v566
        %v568 = vpop.f32.mrb[0].mxu0
        %569 = vmatprep.mubr.f32.mxu0 0.0
        %570 = vmatmul.mubr.f32.gmra.mrb[0].mxu0 %v474
        %v571 = vpop.f32.mrb[0].mxu0
        %v572 = vadd.f32 %v459, %v571
        %v573 = vpop.f32.mrb[0].mxu0
        %574 = vmatprep.mubr.f32.mxu0 0.0
        %575 = vmatmul.mubr.f32.gmra.mrb[0].mxu0 %v477
        %v576 = vpop.f32.mrb[0].mxu0
        %v577 = vadd.f32 %v459, %v576
        %v578 = vpop.f32.mrb[0].mxu0
        %579 = vmatprep.mubr.f32.mxu0 0.0
        %580 = vmatmul.mubr.f32.gmra.mrb[0].mxu0 %v480
        %v581 = vpop.f32.mrb[0].mxu0
        %v582 = vadd.f32 %v459, %v581
        %v583 = vpop.f32.mrb[0].mxu0
        %584 = vmatprep.mubr.f32.mxu0 0.0
        %585 = vmatmul.mubr.f32.gmra.mrb[0].mxu0 %v483
        %v586 = vpop.f32.mrb[0].mxu0
        %v587 = vadd.f32 %v459, %v586
        %v588 = vpop.f32.mrb[0].mxu0
        %589 = vdwg.mxu0
        %v590 = vmax.f32 %v552, 0.0
        %v591 = vmax.f32 %v557, 0.0
        %v592 = vmax.f32 %v562, 0.0
        %v593 = vmax.f32 %v567, 0.0
        %v594 = vmax.f32 %v572, 0.0
        %v595 = vmax.f32 %v577, 0.0
        %v596 = vmax.f32 %v582, 0.0
        %v597 = vmax.f32 %v587, 0.0
        %v599 = vlaneseq
        %v600 = vshrl.u32 %v599, 7
        %v601 = vsub.s32 0, %v600
        %v602 = vrot.slane %v320, %v601
        %vm604 = vcmask 523264
        %v606 = vsel %vm604, %v590, 0
        %v609 = vsel %vm604, %v591, 0
        %v612 = vsel %vm604, %v592, 0
        %v615 = vsel %vm604, %v593, 0
        %v618 = vsel %vm604, %v594, 0
        %v621 = vsel %vm604, %v595, 0
        %v624 = vsel %vm604, %v596, 0
        %v627 = vsel %vm604, %v597, 0
        %629 = vmatprep.subr.mxu0 0.0
        %630 = vmatpush1.msra.mxu0 %v312
        %631 = vmatprep.subr.mxu0 0.0
        %632 = vmatpush1.msra.mxu0 %v313
        %633 = vmatprep.subr.mxu0 0.0
        %634 = vmatpush1.msra.mxu0 %v314
        %635 = vmatprep.subr.mxu0 0.0
        %636 = vmatpush1.msra.mxu0 %v315
        %637 = vmatprep.subr.mxu0 0.0
        %638 = vmatpush1.msra.mxu0 %v316
        %639 = vmatprep.subr.mxu0 0.0
        %640 = vmatpush1.msra.mxu0 %v317
        %641 = vmatprep.subr.mxu0 0.0
        %642 = vmatpush1.msra.mxu0 %v318
        %643 = vmatprep.subr.mxu0 0.0
        %644 = vmatpush1.msra.mxu0 %v319
        %645 = vmatprep.subr.mxu0 0.0
        %646 = vmatpush1.msra.mxu0 0.0
        %647 = vmatprep.subr.mxu0 0.0
        %648 = vmatpush1.msra.mxu0 0.0
        %649 = vmatprep.subr.mxu0 0.0
        %650 = vmatpush1.msra.mxu0 0.0
        %651 = vmatprep.subr.mxu0 0.0
        %652 = vmatpush1.msra.mxu0 0.0
        %653 = vmatprep.subr.mxu0 0.0
        %654 = vmatpush1.msra.mxu0 0.0
        %655 = vmatprep.subr.mxu0 0.0
        %656 = vmatpush1.msra.mxu0 0.0
        %657 = vmatprep.subr.mxu0 0.0
        %658 = vmatpush1.msra.mxu0 0.0
        %659 = vmatprep.subr.mxu0 0.0
        %660 = vmatpush1.msra.mxu0 0.0
        %661 = vmatprep.subr.mxu0 0.0
        %662 = vmatpush1.msra.mxu0 0.0
        %663 = vmatprep.subr.mxu0 0.0
        %664 = vmatpush1.msra.mxu0 0.0
        %665 = vmatprep.subr.mxu0 0.0
        %666 = vmatpush1.msra.mxu0 0.0
        %667 = vmatprep.subr.mxu0 0.0
        %668 = vmatpush1.msra.mxu0 0.0
        %669 = vmatprep.subr.mxu0 0.0
        %670 = vmatpush1.msra.mxu0 0.0
        %671 = vmatprep.subr.mxu0 0.0
        %672 = vmatpush1.msra.mxu0 0.0
        %673 = vmatprep.subr.mxu0 0.0
        %674 = vmatpush1.msra.mxu0 0.0
        %675 = vmatprep.subr.mxu0 0.0
        %676 = vmatpush1.msra.mxu0 0.0
        %677 = vmatprep.subr.mxu0 0.0
        %678 = vmatpush1.msra.mxu0 0.0
        %679 = vmatprep.subr.mxu0 0.0
        %680 = vmatpush1.msra.mxu0 0.0
        %681 = vmatprep.subr.mxu0 0.0
        %682 = vmatpush1.msra.mxu0 0.0
        %683 = vmatprep.subr.mxu0 0.0
        %684 = vmatpush1.msra.mxu0 0.0
        %685 = vmatprep.subr.mxu0 0.0
        %686 = vmatpush1.msra.mxu0 0.0
        %687 = vmatprep.subr.mxu0 0.0
        %688 = vmatpush1.msra.mxu0 0.0
        %689 = vmatprep.subr.mxu0 0.0
        %690 = vmatpush1.msra.mxu0 0.0
        %691 = vmatprep.subr.mxu0 0.0
        %692 = vmatpush1.msra.mxu0 0.0
        %693 = vmatprep.mubr.f32.mxu0 0.0
        %694 = vmatmul.mubr.f32.gmra.mrb[0].mxu0 %v606
        %v695 = vpop.f32.mrb[0].mxu0
        %v696 = vadd.f32 %v602, %v695
        %v697 = vpop.f32.mrb[0].mxu0
        %698 = vmatprep.mubr.f32.mxu0 0.0
        %699 = vmatmul.mubr.f32.gmra.mrb[0].mxu0 %v609
        %v700 = vpop.f32.mrb[0].mxu0
        %v701 = vadd.f32 %v602, %v700
        %v702 = vpop.f32.mrb[0].mxu0
        %703 = vmatprep.mubr.f32.mxu0 0.0
        %704 = vmatmul.mubr.f32.gmra.mrb[0].mxu0 %v612
        %v705 = vpop.f32.mrb[0].mxu0
        %v706 = vadd.f32 %v602, %v705
        %v707 = vpop.f32.mrb[0].mxu0
        %708 = vmatprep.mubr.f32.mxu0 0.0
        %709 = vmatmul.mubr.f32.gmra.mrb[0].mxu0 %v615
        %v710 = vpop.f32.mrb[0].mxu0
        %v711 = vadd.f32 %v602, %v710
        %v712 = vpop.f32.mrb[0].mxu0
        %713 = vmatprep.mubr.f32.mxu0 0.0
        %714 = vmatmul.mubr.f32.gmra.mrb[0].mxu0 %v618
        %v715 = vpop.f32.mrb[0].mxu0
        %v716 = vadd.f32 %v602, %v715
        %v717 = vpop.f32.mrb[0].mxu0
        %718 = vmatprep.mubr.f32.mxu0 0.0
        %719 = vmatmul.mubr.f32.gmra.mrb[0].mxu0 %v621
        %v720 = vpop.f32.mrb[0].mxu0
        %v721 = vadd.f32 %v602, %v720
        %v722 = vpop.f32.mrb[0].mxu0
        %723 = vmatprep.mubr.f32.mxu0 0.0
        %724 = vmatmul.mubr.f32.gmra.mrb[0].mxu0 %v624
        %v725 = vpop.f32.mrb[0].mxu0
        %v726 = vadd.f32 %v602, %v725
        %v727 = vpop.f32.mrb[0].mxu0
        %728 = vmatprep.mubr.f32.mxu0 0.0
        %729 = vmatmul.mubr.f32.gmra.mrb[0].mxu0 %v627
        %v730 = vpop.f32.mrb[0].mxu0
        %v731 = vadd.f32 %v602, %v730
        %v732 = vpop.f32.mrb[0].mxu0
        %733 = vdwg.mxu0
        %v734 = vadd.f32 %v297, %v696
        %v735 = vadd.f32 %v298, %v701
        %v736 = vadd.f32 %v299, %v706
        %v737 = vadd.f32 %v300, %v711
        %v738 = vadd.f32 %v301, %v716
        %v739 = vadd.f32 %v302, %v721
        %v740 = vadd.f32 %v303, %v726
        %v741 = vadd.f32 %v304, %v731
        %v742 = vcombine.low %v734, %v736
        %v743 = vcombine.high %v734, %v736
        %v745 = vunpack.c.l.s4 1983009808
        %v746 = vunpack.c.0.s8 %v745
        %v747 = vlaneseq
        %v748 = vshrl.u32 %v747, 7
        %v749 = vsub.s32 %v746, %v748
        %v750 = vrot.slane %v742, %v749
        %v752 = vunpack.c.l.s4 1983009808
        %v753 = vunpack.c.0.s8 %v752
        %v754 = vlaneseq
        %v755 = vshrl.u32 %v754, 7
        %v756 = vsub.s32 %v753, %v755
        %v757 = vrot.slane %v743, %v756
        %v758 = vcombine.low %v735, %v737
        %v759 = vcombine.high %v735, %v737
        %v761 = vunpack.c.l.s4 1983009808
        %v762 = vunpack.c.0.s8 %v761
        %v763 = vlaneseq
        %v764 = vshrl.u32 %v763, 7
        %v765 = vsub.s32 %v762, %v764
        %v766 = vrot.slane %v758, %v765
        %v768 = vunpack.c.l.s4 1983009808
        %v769 = vunpack.c.0.s8 %v768
        %v770 = vlaneseq
        %v771 = vshrl.u32 %v770, 7
        %v772 = vsub.s32 %v769, %v771
        %v773 = vrot.slane %v759, %v772
        %v774 = vcombine.low %v738, %v740
        %v775 = vcombine.high %v738, %v740
        %v777 = vunpack.c.l.s4 1983009808
        %v778 = vunpack.c.0.s8 %v777
        %v779 = vlaneseq
        %v780 = vshrl.u32 %v779, 7
        %v781 = vsub.s32 %v778, %v780
        %v782 = vrot.slane %v774, %v781
        %v784 = vunpack.c.l.s4 1983009808
        %v785 = vunpack.c.0.s8 %v784
        %v786 = vlaneseq
        %v787 = vshrl.u32 %v786, 7
        %v788 = vsub.s32 %v785, %v787
        %v789 = vrot.slane %v775, %v788
        %v790 = vcombine.low %v739, %v741
        %v791 = vcombine.high %v739, %v741
        %v793 = vunpack.c.l.s4 1983009808
        %v794 = vunpack.c.0.s8 %v793
        %v795 = vlaneseq
        %v796 = vshrl.u32 %v795, 7
        %v797 = vsub.s32 %v794, %v796
        %v798 = vrot.slane %v790, %v797
        %v800 = vunpack.c.l.s4 1983009808
        %v801 = vunpack.c.0.s8 %v800
        %v802 = vlaneseq
        %v803 = vshrl.u32 %v802, 7
        %v804 = vsub.s32 %v801, %v803
        %v805 = vrot.slane %v791, %v804
        %v806 = vcombine.low %v750, %v766
        %v807 = vcombine.high %v750, %v766
        %v809 = vunpack.c.l.s4 1934713408
        %v810 = vunpack.c.0.s8 %v809
        %v811 = vlaneseq
        %v812 = vshrl.u32 %v811, 7
        %v813 = vsub.s32 %v810, %v812
        %v814 = vrot.slane %v806, %v813
        %v816 = vunpack.c.l.s4 1934713408
        %v817 = vunpack.c.0.s8 %v816
        %v818 = vlaneseq
        %v819 = vshrl.u32 %v818, 7
        %v820 = vsub.s32 %v817, %v819
        %v821 = vrot.slane %v807, %v820
        %v822 = vcombine.low %v757, %v773
        %v823 = vcombine.high %v757, %v773
        %v825 = vunpack.c.l.s4 1934713408
        %v826 = vunpack.c.0.s8 %v825
        %v827 = vlaneseq
        %v828 = vshrl.u32 %v827, 7
        %v829 = vsub.s32 %v826, %v828
        %v830 = vrot.slane %v822, %v829
        %v832 = vunpack.c.l.s4 1934713408
        %v833 = vunpack.c.0.s8 %v832
        %v834 = vlaneseq
        %v835 = vshrl.u32 %v834, 7
        %v836 = vsub.s32 %v833, %v835
        %v837 = vrot.slane %v823, %v836
        %v838 = vcombine.low %v782, %v798
        %v839 = vcombine.high %v782, %v798
        %v841 = vunpack.c.l.s4 1934713408
        %v842 = vunpack.c.0.s8 %v841
        %v843 = vlaneseq
        %v844 = vshrl.u32 %v843, 7
        %v845 = vsub.s32 %v842, %v844
        %v846 = vrot.slane %v838, %v845
        %v848 = vunpack.c.l.s4 1934713408
        %v849 = vunpack.c.0.s8 %v848
        %v850 = vlaneseq
        %v851 = vshrl.u32 %v850, 7
        %v852 = vsub.s32 %v849, %v851
        %v853 = vrot.slane %v839, %v852
        %v854 = vcombine.low %v789, %v805
        %v855 = vcombine.high %v789, %v805
        %v857 = vunpack.c.l.s4 1934713408
        %v858 = vunpack.c.0.s8 %v857
        %v859 = vlaneseq
        %v860 = vshrl.u32 %v859, 7
        %v861 = vsub.s32 %v858, %v860
        %v862 = vrot.slane %v854, %v861
        %v864 = vunpack.c.l.s4 1934713408
        %v865 = vunpack.c.0.s8 %v864
        %v866 = vlaneseq
        %v867 = vshrl.u32 %v866, 7
        %v868 = vsub.s32 %v865, %v867
        %v869 = vrot.slane %v855, %v868
        %v870 = vcombine.low %v814, %v846
        %v871 = vcombine.high %v814, %v846
        %v872 = vcombine.low %v821, %v853
        %v873 = vcombine.high %v821, %v853
        %v874 = vcombine.low %v830, %v862
        %v875 = vcombine.high %v830, %v862
        %v876 = vcombine.low %v837, %v869
        %v877 = vcombine.high %v837, %v869
        %v878 = vadd.f32 %v734, %v870
        %v879 = vadd.f32 %v735, %v871
        %v880 = vadd.f32 %v736, %v872
        %v881 = vadd.f32 %v737, %v873
        %v882 = vadd.f32 %v738, %v874
        %v883 = vadd.f32 %v739, %v875
        %v884 = vadd.f32 %v740, %v876
        %v885 = vadd.f32 %v741, %v877
        %v886 = vmul.f32 %v878, 0.5
        %v887 = vmul.f32 %v879, 0.5
        %v888 = vmul.f32 %v880, 0.5
        %v889 = vmul.f32 %v881, 0.5
        %v890 = vmul.f32 %v882, 0.5
        %v891 = vmul.f32 %v883, 0.5
        %v892 = vmul.f32 %v884, 0.5
        %v893 = vmul.f32 %v885, 0.5
        %894 = vst.msk [vmem:[%s296] sm:$0xff] %vm321, %v886
        %895 = vst.msk [vmem:[%s296 + $0x8] sm:$0xff] %vm321, %v887
        %896 = vst.msk [vmem:[%s296 + $0x10] sm:$0xff] %vm321, %v888
        %897 = vst.msk [vmem:[%s296 + $0x18] sm:$0xff] %vm321, %v889
        %898 = vst.msk [vmem:[%s296 + $0x20] sm:$0xff] %vm321, %v890
        %899 = vst.msk [vmem:[%s296 + $0x28] sm:$0xff] %vm321, %v891
        %900 = vst.msk [vmem:[%s296 + $0x30] sm:$0xff] %vm321, %v892
        %901 = vst.msk [vmem:[%s296 + $0x38] sm:$0xff] %vm321, %v893
        %s902 = sand.u32 %s184, 1
        %s903 = scalar_lea.sflag [#allocation4], %s902
        %s904 = sand.u32 %s184, 1
        %s905 = smul.addr %s904, 64
        %s906 = scalar_lea.vmem [#allocation5], %s905
        // Predicated region
        $region53: #{iterative_refinement_forward.1} parent=47 // pred_check
          %p907 = pneg %p194
        $region54: #{iterative_refinement_forward.1} parent=47 // pred_check_branch
          %909 = sbr.rel (%p907) target = $region56
        $region55: #{iterative_refinement_forward.1} parent=47 // pred_region
          %s911 = ssub.s32 1024, 1024
          %912 = vsyncadd %s903, %s911
          %s913 = smul.addr %s24, 8
          %s914 = smul.addr %s913, 128
          %s915 = scalar_lea.hbm %s7, %s914
          %s916 = sshll.u32 %s906, 4
          %s917 = int_to_ptr.vmem [resolvable:$true] %s916
          %922 = dma.vmem_to_hbm [thread:$0]  %s917, 1024, %s915, %s903, 128, 128, 8
        $region56: #{iterative_refinement_forward.1} parent=47 // pred_fallthru
          _
      $region48: #{iterative_refinement_forward.1} parent=5 // pred_fallthru
        _
      %p923 = scmp.le.s32.totalorder 2, %s19
      // Predicated region
      $region57: #{iterative_refinement_forward.1} parent=5 // pred_check
        %p924 = pneg %p923
      $region58: #{iterative_refinement_forward.1} parent=5 // pred_check_branch
        %926 = sbr.rel (%p924) target = $region60
      $region59: #{iterative_refinement_forward.1} parent=5 // pred_region
        %s927 = ssub.s32 %s19, 2
        // Predicated region
        $region61: #{iterative_refinement_forward.1} parent=59 // pred_check
          %p928 = pneg %p200
        $region62: #{iterative_refinement_forward.1} parent=59 // pred_check_branch
          %930 = sbr.rel (%p928) target = $region64
        $region63: #{iterative_refinement_forward.1} parent=59 // pred_region
          %s931 = sand.u32 %s185, 1
          %s932 = scalar_lea.sflag [#allocation4], %s931
          %s933 = sand.u32 %s185, 1
          %s934 = smul.addr %s933, 64
          %s935 = scalar_lea.vmem [#allocation5], %s934
          %936 = dma.done %s932, 1024
        $region64: #{iterative_refinement_forward.1} parent=59 // pred_fallthru
          _
      $region60: #{iterative_refinement_forward.1} parent=5 // pred_fallthru
        _
    $region6: #{iterative_refinement_forward.1} parent=1 // loop_footer
      %s23 = sadd.s32 1, %s19
    $region7: #{iterative_refinement_forward.1} parent=1 // loop_footer_branch
      %18 = sbr.rel target = $region3
    $region8: #{iterative_refinement_forward.1} parent=1 // loop_exit
      _
    %937 = vsyncpa [#allocation3], 1
    %s938 = scalar_lea.sflag [#allocation3], 1
    %939 = vsyncpa %s938, 1
    %940 = vsyncpa [#allocation4], 1
    %s941 = scalar_lea.sflag [#allocation4], 1
    %942 = vsyncpa %s941, 1

</llo_original>
